<compile_context>
chip_gen: v6e
topology: v6e:2x2x1
jax: 0.10.0
libtpu: 0.0.40
codegen_flags: <defaults>
</compile_context>

<pallas_src>
import math
import jax
import jax.numpy as jnp
from jax import lax
from jax.experimental import pallas as pl
from jax.experimental.pallas import tpu as pltpu

N = 32             # DFT length / conv1 kernel size
HOP = 16           # stride
NBF = N // 2 + 1   # 17 frequency points
MAX_TILE = 8192    # frames per grid step (lane-dense layout -> ~7 MB VMEM/step)


def _round_up(a, m):
    return ((a + m - 1) // m) * m


def convdft_kernel(ft_ref, wy_ref, by_ref, wtst_ref, bts_ref, y_ref, tst_ref):
    # ft: (N, tf) frames transposed -- taps on sublanes, frames (F) on lanes.
    ft = ft_ref[...]

    # y block (2*NBF, tf): final channel-major layout, lane-dense in F.
    y_ref[...] = (jnp.dot(wy_ref[...], ft,
                          preferred_element_type=jnp.float32)
                  + by_ref[...])

    # ts^T block (N, tf): fused DFT -> inverse-DFT stage, lane-dense in F.
    tst_ref[...] = (jnp.dot(wtst_ref[...], ft,
                            preferred_element_type=jnp.float32)
                    + bts_ref[...])


def convdft_forward(x, wr, br, wi, bi, wir, bir, wii, bii):
    """x: (1, L) float32.  Returns (y: (2*NBF, F), time_signal: (F, N))."""
    B, L = x.shape
    assert B == 1, "module semantics (squeeze(0)/.T) require batch == 1"
    F = (L - N) // HOP + 1
    sig = x[0].astype(jnp.float32)

    # --- fused weights / biases (tiny, precomputed once in XLA) ---
    wr2, wi2 = wr[:, 0, :], wi[:, 0, :]               # (NBF, N)
    wir2, wii2 = wir[:, 0, :], wii[:, 0, :]           # (N, NBF)
    w_y = jnp.concatenate([wr2, wi2], axis=0)                      # (2*NBF, N)
    b_y = jnp.concatenate([br, bi], axis=0)[:, None]               # (2*NBF, 1)
    hp = lax.Precision.HIGHEST
    w_ts = (jnp.dot(wr2.T, wir2.T, precision=hp)
            - jnp.dot(wi2.T, wii2.T, precision=hp))                # (N, N) taps->time
    w_ts_t = w_ts.T                                                # (N, N) for ts^T
    b_ts = (jnp.dot(br, wir2.T, precision=hp)
            - jnp.dot(bi, wii2.T, precision=hp) + bir - bii)[:, None]  # (N, 1)

    # --- frames transposed: ft[k, f] = sig[f*HOP + k]; F sits on lanes ---
    s2 = sig[:(F + 1) * HOP].reshape(F + 1, HOP)      # contiguous slice + reshape
    ft = jnp.concatenate([s2[:F].T, s2[1:F + 1].T], axis=0)        # (N, F)

    # --- F tiling: big lane-dense tiles; >=2 grid steps for large F (v7x) ---
    tf_target = pl.cdiv(F, 2) if F > 2048 else F
    tf = min(MAX_TILE, _round_up(tf_target, 128))
    f_pad = pl.cdiv(F, tf) * tf
    if f_pad != F:
        ft = jnp.pad(ft, ((0, 0), (0, f_pad - F)))
    grid = (f_pad // tf,)

    param_bytes = 4 * (2 * NBF * N + 2 * NBF + N * N + N)
    cost = pl.CostEstimate(
        flops=2 * (2 * NBF + N) * N * f_pad,
        transcendentals=0,
        bytes_accessed=4 * (N + 2 * NBF + N) * f_pad + param_bytes,
    )

    y, ts_t = pl.pallas_call(
        convdft_kernel,
        grid=grid,
        in_specs=[
            pl.BlockSpec((N, tf), lambda i: (0, i)),          # ft (frames^T)
            pl.BlockSpec((2 * NBF, N), lambda i: (0, 0)),     # W_y   (resident)
            pl.BlockSpec((2 * NBF, 1), lambda i: (0, 0)),     # b_y
            pl.BlockSpec((N, N), lambda i: (0, 0)),           # W_ts^T
            pl.BlockSpec((N, 1), lambda i: (0, 0)),           # b_ts
        ],
        out_specs=(
            pl.BlockSpec((2 * NBF, tf), lambda i: (0, i)),    # y    (34, F)
            pl.BlockSpec((N, tf), lambda i: (0, i)),          # ts^T (32, F)
        ),
        out_shape=(
            jax.ShapeDtypeStruct((2 * NBF, f_pad), jnp.float32),
            jax.ShapeDtypeStruct((N, f_pad), jnp.float32),
        ),
        compiler_params=pltpu.CompilerParams(
            dimension_semantics=("parallel",),
            vmem_limit_bytes=32 * 1024 * 1024),
        cost_estimate=cost,
    )(ft, w_y, b_y, w_ts_t, b_ts)

    if f_pad != F:
        y = y[:, :F]
        ts_t = ts_t[:, :F]
    return y, ts_t.T            # module contract: time_signal is (F, N)


def init_params(key):
    """Deterministic Conv1d-style init (uniform +/- 1/sqrt(fan_in))."""
    ks = jax.random.split(key, 8)

    def u(k, shape, fan_in):
        bound = 1.0 / math.sqrt(fan_in)
        return jax.random.uniform(k, shape, jnp.float32, -bound, bound)

    wr = u(ks[0], (NBF, 1, N), N)
    br = u(ks[1], (NBF,), N)
    wi = u(ks[2], (NBF, 1, N), N)
    bi = u(ks[3], (NBF,), N)
    wir = u(ks[4], (N, 1, NBF), NBF)
    bir = u(ks[5], (N,), NBF)
    wii = u(ks[6], (N, 1, NBF), NBF)
    bii = u(ks[7], (N,), NBF)
    return wr, br, wi, bi, wir, bir, wii, bii


def _reference(x, params):
    """Pure-JAX (unfused) reference."""
    wr, br, wi, bi, wir, bir, wii, bii = params
    L = x.shape[1]
    F = (L - N) // HOP + 1
    idx = jnp.arange(F)[:, None] * HOP + jnp.arange(N)[None, :]
    frames = x[0][idx]
    yr = frames @ wr[:, 0, :].T + br
    yi = frames @ wi[:, 0, :].T + bi
    y_ref = jnp.concatenate([yr.T, yi.T], axis=0)
    ts_ref = yr @ wir[:, 0, :].T + bir - (yi @ wii[:, 0, :].T + bii)
    return y_ref, ts_ref


if __name__ == "__main__":
    key = jax.random.PRNGKey(0)
    k_x1, k_x2, k_p = jax.random.split(key, 3)
    params = init_params(k_p)

    # small case: L = 144 -> F = 8 frames (single grid step, padded tile)
    L1 = 144
    x1 = jax.random.normal(k_x1, (1, L1), dtype=jnp.float32)
    y1, ts1 = convdft_forward(x1, *params)
    y1 = jax.block_until_ready(y1)
    ts1 = jax.block_until_ready(ts1)
    F1 = (L1 - N) // HOP + 1
    y1_ref, ts1_ref = _reference(x1, params)
    assert y1.shape == (2 * NBF, F1) and ts1.shape == (F1, N)
    assert jnp.allclose(y1, y1_ref, atol=1e-3, rtol=1e-3)
    assert jnp.allclose(ts1, ts1_ref, atol=1e-3, rtol=1e-3)

    # larger case: F = 2500 -> 2 grid steps (exercises tile split + tail pad)
    F2 = 2500
    L2 = (F2 - 1) * HOP + N
    x2 = jax.random.normal(k_x2, (1, L2), dtype=jnp.float32)
    y2, ts2 = convdft_forward(x2, *params)
    y2 = jax.block_until_ready(y2)
    ts2 = jax.block_until_ready(ts2)
    y2_ref, ts2_ref = _reference(x2, params)
    assert y2.shape == (2 * NBF, F2) and ts2.shape == (F2, N)
    assert jnp.allclose(y2, y2_ref, atol=1e-3, rtol=1e-3)
    assert jnp.allclose(ts2, ts2_ref, atol=1e-3, rtol=1e-3)

    print("KERNEL_OK")
</pallas_src>

<mosaic_0001>
module attributes {stable_mosaic.version = 11 : i64} {
  func.func @convdft_kernel(%arg0: i32, %arg1: memref<32x128xf32, #tpu.memory_space<vmem>>, %arg2: memref<34x32xf32, #tpu.memory_space<vmem>>, %arg3: memref<34x1xf32, #tpu.memory_space<vmem>>, %arg4: memref<32x32xf32, #tpu.memory_space<vmem>>, %arg5: memref<32x1xf32, #tpu.memory_space<vmem>>, %arg6: memref<34x128xf32, #tpu.memory_space<vmem>>, %arg7: memref<32x128xf32, #tpu.memory_space<vmem>>) attributes {dimension_semantics = [#tpu.dimension_semantics<parallel>], iteration_bounds = array<i64: 1>, scalar_prefetch = 0 : i64, scratch_operands = 0 : i64, tpu.core_type = #tpu.core_type<tc>, window_params = [{transform_indices = @transform_0, window_bounds = array<i64: 32, 128>}, {pipeline_mode = #tpu.pipeline_mode<synchronous>, transform_indices = @transform_1, window_bounds = array<i64: 34, 32>}, {pipeline_mode = #tpu.pipeline_mode<synchronous>, transform_indices = @transform_2, window_bounds = array<i64: 34, 1>}, {pipeline_mode = #tpu.pipeline_mode<synchronous>, transform_indices = @transform_3, window_bounds = array<i64: 32, 32>}, {pipeline_mode = #tpu.pipeline_mode<synchronous>, transform_indices = @transform_4, window_bounds = array<i64: 32, 1>}, {transform_indices = @transform_5, window_bounds = array<i64: 34, 128>}, {transform_indices = @transform_6, window_bounds = array<i64: 32, 128>}]} {
    %c0 = arith.constant 0 : index
    %c0_0 = arith.constant 0 : index
    %0 = vector.load %arg1[%c0, %c0_0] : memref<32x128xf32, #tpu.memory_space<vmem>>, vector<32x128xf32>
    %c0_1 = arith.constant 0 : index
    %c0_2 = arith.constant 0 : index
    %1 = vector.load %arg2[%c0_1, %c0_2] : memref<34x32xf32, #tpu.memory_space<vmem>>, vector<34x32xf32>
    %cst = arith.constant dense<0.000000e+00> : vector<34x128xf32>
    %2 = tpu.matmul %1, %0, %cst {dimension_numbers = #tpu.dot_dimension_numbers<[1], [0], [0], [1], [0, 0, 1, 1], [], []>} : vector<34x32xf32>, vector<32x128xf32>, vector<34x128xf32> -> vector<34x128xf32>
    %c0_3 = arith.constant 0 : index
    %c0_4 = arith.constant 0 : index
    %3 = vector.load %arg3[%c0_3, %c0_4] : memref<34x1xf32, #tpu.memory_space<vmem>>, vector<34x1xf32>
    %4 = vector.broadcast %3 : vector<34x1xf32> to vector<34x128xf32>
    %5 = arith.addf %2, %4 : vector<34x128xf32>
    %c0_5 = arith.constant 0 : index
    %c0_6 = arith.constant 0 : index
    %6 = vector.load %arg6[%c0_5, %c0_6] : memref<34x128xf32, #tpu.memory_space<vmem>>, vector<34x128xf32>
    tpu.vector_store %arg6[%c0_5, %c0_6], %5 {strides = array<i32>} : memref<34x128xf32, #tpu.memory_space<vmem>>, vector<34x128xf32>,
    %c0_7 = arith.constant 0 : index
    %c0_8 = arith.constant 0 : index
    %7 = vector.load %arg4[%c0_7, %c0_8] : memref<32x32xf32, #tpu.memory_space<vmem>>, vector<32x32xf32>
    %cst_9 = arith.constant dense<0.000000e+00> : vector<32x128xf32>
    %8 = tpu.matmul %7, %0, %cst_9 {dimension_numbers = #tpu.dot_dimension_numbers<[1], [0], [0], [1], [0, 0, 1, 1], [], []>} : vector<32x32xf32>, vector<32x128xf32>, vector<32x128xf32> -> vector<32x128xf32>
    %c0_10 = arith.constant 0 : index
    %c0_11 = arith.constant 0 : index
    %9 = vector.load %arg5[%c0_10, %c0_11] : memref<32x1xf32, #tpu.memory_space<vmem>>, vector<32x1xf32>
    %10 = vector.broadcast %9 : vector<32x1xf32> to vector<32x128xf32>
    %11 = arith.addf %8, %10 : vector<32x128xf32>
    %c0_12 = arith.constant 0 : index
    %c0_13 = arith.constant 0 : index
    %12 = vector.load %arg7[%c0_12, %c0_13] : memref<32x128xf32, #tpu.memory_space<vmem>>, vector<32x128xf32>
    tpu.vector_store %arg7[%c0_12, %c0_13], %11 {strides = array<i32>} : memref<32x128xf32, #tpu.memory_space<vmem>>, vector<32x128xf32>,
    return
  }
  func.func @transform_0(%arg0: i32) -> (i32, i32) {
    %c0_i32 = arith.constant 0 : i32
    %c0_i32_0 = arith.constant 0 : i32
    return %c0_i32, %arg0 : i32, i32
  }
  func.func @transform_1(%arg0: i32) -> (i32, i32) {
    %c0_i32 = arith.constant 0 : i32
    %c0_i32_0 = arith.constant 0 : i32
    %c0_i32_1 = arith.constant 0 : i32
    return %c0_i32, %c0_i32_0 : i32, i32
  }
  func.func @transform_2(%arg0: i32) -> (i32, i32) {
    %c0_i32 = arith.constant 0 : i32
    %c0_i32_0 = arith.constant 0 : i32
    %c0_i32_1 = arith.constant 0 : i32
    return %c0_i32, %c0_i32_0 : i32, i32
  }
  func.func @transform_3(%arg0: i32) -> (i32, i32) {
    %c0_i32 = arith.constant 0 : i32
    %c0_i32_0 = arith.constant 0 : i32
    %c0_i32_1 = arith.constant 0 : i32
    return %c0_i32, %c0_i32_0 : i32, i32
  }
  func.func @transform_4(%arg0: i32) -> (i32, i32) {
    %c0_i32 = arith.constant 0 : i32
    %c0_i32_0 = arith.constant 0 : i32
    %c0_i32_1 = arith.constant 0 : i32
    return %c0_i32, %c0_i32_0 : i32, i32
  }
  func.func @transform_5(%arg0: i32) -> (i32, i32) {
    %c0_i32 = arith.constant 0 : i32
    %c0_i32_0 = arith.constant 0 : i32
    return %c0_i32, %arg0 : i32, i32
  }
  func.func @transform_6(%arg0: i32) -> (i32, i32) {
    %c0_i32 = arith.constant 0 : i32
    %c0_i32_0 = arith.constant 0 : i32
    return %c0_i32, %arg0 : i32, i32
  }
}

</mosaic_0001>

<llo_original>
// kernel: tpu_custom_call.1
$region0: #{tpu_custom_call.1}
  #allocation0 [shape = 'u32[]', space=smem, size = 0x4, offset = 0x4, fixed_abs, tag = 'smem constant byte address 0x4 - core index']
  #allocation1 [shape = 'u32[144,128]{1,0:T(1,128)}', space=vmem, size = 0x12000, scoped, tag = 'internal scratch']
  %s0 = inlined_call_operand.vmem [shape: f32[32,128], index: 0, kind: input, shape index: {}]
  %s1 = inlined_call_operand.vmem [shape: f32[34,32], index: 1, kind: input, shape index: {}]
  %s2 = inlined_call_operand.vmem [shape: f32[34,1], index: 2, kind: input, shape index: {}]
  %s3 = inlined_call_operand.vmem [shape: f32[32,32], index: 3, kind: input, shape index: {}]
  %s4 = inlined_call_operand.vmem [shape: f32[32,1], index: 4, kind: input, shape index: {}]
  %s5 = inlined_call_operand.hbm [shape: f32[34,128], index: 5, kind: output, shape index: {0}]
  %s6 = inlined_call_operand.hbm [shape: f32[32,128], index: 6, kind: output, shape index: {1}]
  %7 = xla_tuple %s5, %s6
  %s8 = sld [smem:[#allocation0]]
  $region38: #{tpu_custom_call.1} parent=0
    _
  %s10 = ssub.s32 1, %s8
  %s11 = scalar_select 0, %s10, %s8
  $region1: #{tpu_custom_call.1} parent=0
    #allocation2 [shape = 'u8[20480]{0}', space=vmem, size = 0x5000, scoped, tag = 'output window, operand 0, single buffered']
    #allocation3 [shape = 's32[1]{0}', space=sflag, size = 0x4, scoped, tag = 'scoped memory for tpu_custom_call.1']
    #allocation4 [shape = 'u8[16384]{0}', space=vmem, size = 0x4000, scoped, tag = 'output window, operand 1, single buffered']
    #allocation5 [shape = 's32[1]{0}', space=sflag, size = 0x4, scoped, tag = 'scoped memory for tpu_custom_call.1']
    %12 = vsyncpa [#allocation3], 0
    %13 = vsyncpa [#allocation5], 0
    // Predicated region
    $region2: #{tpu_custom_call.1} parent=1 // pred_check
      _
    $region3: #{tpu_custom_call.1} parent=1 // pred_check_branch
      %15 = sbr.rel (0) target = $region5
    $region4: #{tpu_custom_call.1} parent=1 // pred_region
      _
    $region5: #{tpu_custom_call.1} parent=1 // pred_fallthru
      _
    // Predicated region
    $region6: #{tpu_custom_call.1} parent=1 // pred_check
      _
    $region7: #{tpu_custom_call.1} parent=1 // pred_check_branch
      %17 = sbr.rel (0) target = $region9
    $region8: #{tpu_custom_call.1} parent=1 // pred_region
      _
    $region9: #{tpu_custom_call.1} parent=1 // pred_fallthru
      _
    // Predicated region
    $region10: #{tpu_custom_call.1} parent=1 // pred_check
      _
    $region11: #{tpu_custom_call.1} parent=1 // pred_check_branch
      %19 = sbr.rel (0) target = $region13
    $region12: #{tpu_custom_call.1} parent=1 // pred_region
      _
    $region13: #{tpu_custom_call.1} parent=1 // pred_fallthru
      _
    // Predicated region
    $region14: #{tpu_custom_call.1} parent=1 // pred_check
      _
    $region15: #{tpu_custom_call.1} parent=1 // pred_check_branch
      %21 = sbr.rel (0) target = $region17
    $region16: #{tpu_custom_call.1} parent=1 // pred_region
      _
    $region17: #{tpu_custom_call.1} parent=1 // pred_fallthru
      _
    // Predicated region
    $region18: #{tpu_custom_call.1} parent=1 // pred_check
      _
    $region19: #{tpu_custom_call.1} parent=1 // pred_check_branch
      %23 = sbr.rel (0) target = $region21
    $region20: #{tpu_custom_call.1} parent=1 // pred_region
      _
    $region21: #{tpu_custom_call.1} parent=1 // pred_fallthru
      _
    %v24 = vld [vmem:[%s0] sm:$0xff]
    %v25 = vld [vmem:[%s0 + $0x8] sm:$0xff]
    %v26 = vld [vmem:[%s0 + $0x10] sm:$0xff]
    %v27 = vld [vmem:[%s0 + $0x18] sm:$0xff]
    %v28 = vld [vmem:[%s1] sm:$0xff]
    %v29 = vld [vmem:[%s1 + $0x8] sm:$0xff]
    %v30 = vld [vmem:[%s1 + $0x10] sm:$0xff]
    %v31 = vld [vmem:[%s1 + $0x18] sm:$0xff]
    %v32 = vld [vmem:[%s1 + $0x20] sm:$0x3]
    %v33 = vld [vmem:[%s2] sm:$0xff]
    %v34 = vld [vmem:[%s2 + $0x8] sm:$0xff]
    %v35 = vld [vmem:[%s2 + $0x10] sm:$0xff]
    %v36 = vld [vmem:[%s2 + $0x18] sm:$0xff]
    %v37 = vld [vmem:[%s2 + $0x20] sm:$0x3]
    %39 = vset.pattern.permute.xlu0 0
    %40 = vperm.xlu0 %39, %v33
    %v41 = vpop.permute.xlu0 %40
    %44 = vset.pattern.permute.xlu0 0
    %45 = vperm.xlu0 %44, %v34
    %v46 = vpop.permute.xlu0 %45
    %49 = vset.pattern.permute.xlu0 0
    %50 = vperm.xlu0 %49, %v35
    %v51 = vpop.permute.xlu0 %50
    %54 = vset.pattern.permute.xlu0 0
    %55 = vperm.xlu0 %54, %v36
    %v56 = vpop.permute.xlu0 %55
    %59 = vset.pattern.permute.xlu0 0
    %60 = vperm.xlu0 %59, %v37
    %v61 = vpop.permute.xlu0 %60
    %vm63 = vcmask 261120
    %v65 = vsel %vm63, %v28, 0
    %v68 = vsel %vm63, %v29, 0
    %v71 = vsel %vm63, %v30, 0
    %v74 = vsel %vm63, %v31, 0
    %v77 = vsel %vm63, %v32, 0
    %79 = vmatprep.subr.mxu0 0.0
    %80 = vmatpush1.msra.mxu0 0.0
    %81 = vmatprep.subr.mxu0 0.0
    %82 = vmatpush1.msra.mxu0 0.0
    %83 = vmatprep.subr.mxu0 0.0
    %84 = vmatpush1.msra.mxu0 0.0
    %85 = vmatprep.subr.mxu0 0.0
    %86 = vmatpush1.msra.mxu0 0.0
    %87 = vmatprep.subr.mxu0 0.0
    %88 = vmatpush1.msra.mxu0 0.0
    %89 = vmatprep.subr.mxu0 0.0
    %90 = vmatpush1.msra.mxu0 0.0
    %91 = vmatprep.subr.mxu0 0.0
    %92 = vmatpush1.msra.mxu0 0.0
    %93 = vmatprep.subr.mxu0 0.0
    %94 = vmatpush1.msra.mxu0 0.0
    %95 = vmatprep.subr.mxu0 0.0
    %96 = vmatpush1.msra.mxu0 0.0
    %97 = vmatprep.subr.mxu0 0.0
    %98 = vmatpush1.msra.mxu0 0.0
    %99 = vmatprep.subr.mxu0 0.0
    %100 = vmatpush1.msra.mxu0 0.0
    %101 = vmatprep.subr.mxu0 0.0
    %102 = vmatpush1.msra.mxu0 0.0
    %103 = vmatprep.subr.mxu0 0.0
    %104 = vmatpush1.msra.mxu0 %v27
    %105 = vmatprep.subr.mxu0 0.0
    %106 = vmatpush1.msra.mxu0 %v26
    %107 = vmatprep.subr.mxu0 0.0
    %108 = vmatpush1.msra.mxu0 %v25
    %109 = vmatprep.subr.mxu0 0.0
    %110 = vmatpush1.msra.mxu0 %v24
    %111 = vmatprep.subr.mxu0 0.0
    %112 = vmatpush2.msra.mxu0 0.0
    %113 = vmatprep.subr.mxu0 0.0
    %114 = vmatpush2.msra.mxu0 0.0
    %115 = vmatprep.subr.mxu0 0.0
    %116 = vmatpush2.msra.mxu0 0.0
    %117 = vmatprep.subr.mxu0 0.0
    %118 = vmatpush2.msra.mxu0 0.0
    %119 = vmatprep.subr.mxu0 0.0
    %120 = vmatpush2.msra.mxu0 0.0
    %121 = vmatprep.subr.mxu0 0.0
    %122 = vmatpush2.msra.mxu0 0.0
    %123 = vmatprep.subr.mxu0 0.0
    %124 = vmatpush2.msra.mxu0 0.0
    %125 = vmatprep.subr.mxu0 0.0
    %126 = vmatpush2.msra.mxu0 0.0
    %127 = vmatprep.subr.mxu0 0.0
    %128 = vmatpush2.msra.mxu0 0.0
    %129 = vmatprep.subr.mxu0 0.0
    %130 = vmatpush2.msra.mxu0 0.0
    %131 = vmatprep.subr.mxu0 0.0
    %132 = vmatpush2.msra.mxu0 0.0
    %133 = vmatprep.subr.mxu0 0.0
    %134 = vmatpush2.msra.mxu0 0.0
    %135 = vmatprep.subr.mxu0 0.0
    %136 = vmatpush2.msra.mxu0 0.0
    %137 = vmatprep.subr.mxu0 0.0
    %138 = vmatpush2.msra.mxu0 0.0
    %139 = vmatprep.subr.mxu0 0.0
    %140 = vmatpush2.msra.mxu0 0.0
    %141 = vmatprep.subr.mxu0 0.0
    %142 = vmatpush2.msra.mxu0 0.0
    %143 = vmatprep.mubr.f32.mxu0 0.0
    %144 = vmatmul.mubr.f32.gmra.mxu0 %v65
    %v145 = vpop.f32.mrf.mxu0
    %v146 = vadd.f32 %v41, %v145
    %v147 = vpop.f32.mrf.mxu0
    %148 = vmatprep.mubr.f32.mxu0 0.0
    %149 = vmatmul.mubr.f32.gmra.mxu0 %v68
    %v150 = vpop.f32.mrf.mxu0
    %v151 = vadd.f32 %v46, %v150
    %v152 = vpop.f32.mrf.mxu0
    %153 = vmatprep.mubr.f32.mxu0 0.0
    %154 = vmatmul.mubr.f32.gmra.mxu0 %v71
    %v155 = vpop.f32.mrf.mxu0
    %v156 = vadd.f32 %v51, %v155
    %v157 = vpop.f32.mrf.mxu0
    %158 = vmatprep.mubr.f32.mxu0 0.0
    %159 = vmatmul.mubr.f32.gmra.mxu0 %v74
    %v160 = vpop.f32.mrf.mxu0
    %v161 = vadd.f32 %v56, %v160
    %v162 = vpop.f32.mrf.mxu0
    %163 = vmatprep.mubr.f32.mxu0 0.0
    %164 = vmatmul.mubr.f32.gmra.mxu0 %v77
    %v165 = vpop.f32.mrf.mxu0
    %v166 = vadd.f32 %v61, %v165
    %v167 = vpop.f32.mrf.mxu0
    %168 = vdwg.mxu0
    %169 = vst [vmem:[#allocation2] sm:$0xff] %v146
    %170 = vst [vmem:[#allocation2 + $0x8] sm:$0xff] %v151
    %171 = vst [vmem:[#allocation2 + $0x10] sm:$0xff] %v156
    %172 = vst [vmem:[#allocation2 + $0x18] sm:$0xff] %v161
    %173 = vst [vmem:[#allocation2 + $0x20] sm:$0x3] %v166
    %v174 = vld [vmem:[%s3] sm:$0xff]
    %v175 = vld [vmem:[%s3 + $0x8] sm:$0xff]
    %v176 = vld [vmem:[%s3 + $0x10] sm:$0xff]
    %v177 = vld [vmem:[%s3 + $0x18] sm:$0xff]
    %v178 = vld [vmem:[%s4] sm:$0xff]
    %v179 = vld [vmem:[%s4 + $0x8] sm:$0xff]
    %v180 = vld [vmem:[%s4 + $0x10] sm:$0xff]
    %v181 = vld [vmem:[%s4 + $0x18] sm:$0xff]
    %183 = vset.pattern.permute.xlu0 0
    %184 = vperm.xlu0 %183, %v178
    %v185 = vpop.permute.xlu0 %184
    %188 = vset.pattern.permute.xlu0 0
    %189 = vperm.xlu0 %188, %v179
    %v190 = vpop.permute.xlu0 %189
    %193 = vset.pattern.permute.xlu0 0
    %194 = vperm.xlu0 %193, %v180
    %v195 = vpop.permute.xlu0 %194
    %198 = vset.pattern.permute.xlu0 0
    %199 = vperm.xlu0 %198, %v181
    %v200 = vpop.permute.xlu0 %199
    %v203 = vsel %vm63, %v174, 0
    %v206 = vsel %vm63, %v175, 0
    %v209 = vsel %vm63, %v176, 0
    %v212 = vsel %vm63, %v177, 0
    %214 = vmatprep.subr.mxu0 0.0
    %215 = vmatpush1.msra.mxu0 0.0
    %216 = vmatprep.subr.mxu0 0.0
    %217 = vmatpush1.msra.mxu0 0.0
    %218 = vmatprep.subr.mxu0 0.0
    %219 = vmatpush1.msra.mxu0 0.0
    %220 = vmatprep.subr.mxu0 0.0
    %221 = vmatpush1.msra.mxu0 0.0
    %222 = vmatprep.subr.mxu0 0.0
    %223 = vmatpush1.msra.mxu0 0.0
    %224 = vmatprep.subr.mxu0 0.0
    %225 = vmatpush1.msra.mxu0 0.0
    %226 = vmatprep.subr.mxu0 0.0
    %227 = vmatpush1.msra.mxu0 0.0
    %228 = vmatprep.subr.mxu0 0.0
    %229 = vmatpush1.msra.mxu0 0.0
    %230 = vmatprep.subr.mxu0 0.0
    %231 = vmatpush1.msra.mxu0 0.0
    %232 = vmatprep.subr.mxu0 0.0
    %233 = vmatpush1.msra.mxu0 0.0
    %234 = vmatprep.subr.mxu0 0.0
    %235 = vmatpush1.msra.mxu0 0.0
    %236 = vmatprep.subr.mxu0 0.0
    %237 = vmatpush1.msra.mxu0 0.0
    %238 = vmatprep.subr.mxu0 0.0
    %239 = vmatpush1.msra.mxu0 %v27
    %240 = vmatprep.subr.mxu0 0.0
    %241 = vmatpush1.msra.mxu0 %v26
    %242 = vmatprep.subr.mxu0 0.0
    %243 = vmatpush1.msra.mxu0 %v25
    %244 = vmatprep.subr.mxu0 0.0
    %245 = vmatpush1.msra.mxu0 %v24
    %246 = vmatprep.subr.mxu0 0.0
    %247 = vmatpush2.msra.mxu0 0.0
    %248 = vmatprep.subr.mxu0 0.0
    %249 = vmatpush2.msra.mxu0 0.0
    %250 = vmatprep.subr.mxu0 0.0
    %251 = vmatpush2.msra.mxu0 0.0
    %252 = vmatprep.subr.mxu0 0.0
    %253 = vmatpush2.msra.mxu0 0.0
    %254 = vmatprep.subr.mxu0 0.0
    %255 = vmatpush2.msra.mxu0 0.0
    %256 = vmatprep.subr.mxu0 0.0
    %257 = vmatpush2.msra.mxu0 0.0
    %258 = vmatprep.subr.mxu0 0.0
    %259 = vmatpush2.msra.mxu0 0.0
    %260 = vmatprep.subr.mxu0 0.0
    %261 = vmatpush2.msra.mxu0 0.0
    %262 = vmatprep.subr.mxu0 0.0
    %263 = vmatpush2.msra.mxu0 0.0
    %264 = vmatprep.subr.mxu0 0.0
    %265 = vmatpush2.msra.mxu0 0.0
    %266 = vmatprep.subr.mxu0 0.0
    %267 = vmatpush2.msra.mxu0 0.0
    %268 = vmatprep.subr.mxu0 0.0
    %269 = vmatpush2.msra.mxu0 0.0
    %270 = vmatprep.subr.mxu0 0.0
    %271 = vmatpush2.msra.mxu0 0.0
    %272 = vmatprep.subr.mxu0 0.0
    %273 = vmatpush2.msra.mxu0 0.0
    %274 = vmatprep.subr.mxu0 0.0
    %275 = vmatpush2.msra.mxu0 0.0
    %276 = vmatprep.subr.mxu0 0.0
    %277 = vmatpush2.msra.mxu0 0.0
    %278 = vmatprep.mubr.f32.mxu0 0.0
    %279 = vmatmul.mubr.f32.gmra.mxu0 %v203
    %v280 = vpop.f32.mrf.mxu0
    %v281 = vadd.f32 %v185, %v280
    %v282 = vpop.f32.mrf.mxu0
    %283 = vmatprep.mubr.f32.mxu0 0.0
    %284 = vmatmul.mubr.f32.gmra.mxu0 %v206
    %v285 = vpop.f32.mrf.mxu0
    %v286 = vadd.f32 %v190, %v285
    %v287 = vpop.f32.mrf.mxu0
    %288 = vmatprep.mubr.f32.mxu0 0.0
    %289 = vmatmul.mubr.f32.gmra.mxu0 %v209
    %v290 = vpop.f32.mrf.mxu0
    %v291 = vadd.f32 %v195, %v290
    %v292 = vpop.f32.mrf.mxu0
    %293 = vmatprep.mubr.f32.mxu0 0.0
    %294 = vmatmul.mubr.f32.gmra.mxu0 %v212
    %v295 = vpop.f32.mrf.mxu0
    %v296 = vadd.f32 %v200, %v295
    %v297 = vpop.f32.mrf.mxu0
    %298 = vdwg.mxu0
    %299 = vst [vmem:[#allocation4] sm:$0xff] %v281
    %300 = vst [vmem:[#allocation4 + $0x8] sm:$0xff] %v286
    %301 = vst [vmem:[#allocation4 + $0x10] sm:$0xff] %v291
    %302 = vst [vmem:[#allocation4 + $0x18] sm:$0xff] %v296
    // Predicated region
    $region22: #{tpu_custom_call.1} parent=1 // pred_check
      _
    $region23: #{tpu_custom_call.1} parent=1 // pred_check_branch
      %304 = sbr.rel (0) target = $region25
    $region24: #{tpu_custom_call.1} parent=1 // pred_region
      %s306 = ssub.s32 640, 640
      %307 = vsyncadd [#allocation3], %s306
      %s308 = sshll.u32 [#allocation2], 4
      %s309 = int_to_ptr.vmem [resolvable:$true] %s308
      %314 = dma.vmem_to_hbm [thread:$0]  %s309, 640, %s5, [#allocation3], 128, 128, 8
    $region25: #{tpu_custom_call.1} parent=1 // pred_fallthru
      _
    // Predicated region
    $region26: #{tpu_custom_call.1} parent=1 // pred_check
      _
    $region27: #{tpu_custom_call.1} parent=1 // pred_check_branch
      %316 = sbr.rel (0) target = $region29
    $region28: #{tpu_custom_call.1} parent=1 // pred_region
      %s318 = ssub.s32 512, 512
      %319 = vsyncadd [#allocation5], %s318
      %s320 = sshll.u32 [#allocation4], 4
      %s321 = int_to_ptr.vmem [resolvable:$true] %s320
      %326 = dma.vmem_to_hbm [thread:$0]  %s321, 512, %s6, [#allocation5], 128, 128, 8
    $region29: #{tpu_custom_call.1} parent=1 // pred_fallthru
      _
    // Predicated region
    $region30: #{tpu_custom_call.1} parent=1 // pred_check
      _
    $region31: #{tpu_custom_call.1} parent=1 // pred_check_branch
      %328 = sbr.rel (0) target = $region33
    $region32: #{tpu_custom_call.1} parent=1 // pred_region
      %329 = dma.done [#allocation3], 640
    $region33: #{tpu_custom_call.1} parent=1 // pred_fallthru
      _
    // Predicated region
    $region34: #{tpu_custom_call.1} parent=1 // pred_check
      _
    $region35: #{tpu_custom_call.1} parent=1 // pred_check_branch
      %331 = sbr.rel (0) target = $region37
    $region36: #{tpu_custom_call.1} parent=1 // pred_region
      %332 = dma.done [#allocation5], 512
    $region37: #{tpu_custom_call.1} parent=1 // pred_fallthru
      _
    %333 = vsyncpa [#allocation3], 1
    %334 = vsyncpa [#allocation5], 1

</llo_original>
